<compile_context>
chip_gen: v7x
topology: tpu7x:2x2x1
jax: 0.10.0
libtpu: 0.0.40
codegen_flags: <defaults>
</compile_context>

<pallas_src>
import functools

import jax
import jax.numpy as jnp
from jax.experimental import pallas as pl
from jax.experimental.pallas import tpu as pltpu

BN_EPS = 1e-5
_SMALL_PATH_MAX_BYTES = 2 * 1024 * 1024   # x + y + out footprint threshold


# --------------------------------------------------------------------------- #
# Small path: single-shot fused kernel (whole problem resident in VMEM).
# --------------------------------------------------------------------------- #
def _fused_small_kernel(x_ref, w_ref, g_ref, b_ref, o_ref, *, inv_m):
    # x_ref: (N, Cin, HW)   w_ref: (Cout, Cin)
    # g_ref/b_ref: (1, Cout, 1)   o_ref: (N, Cout, HW)
    x = x_ref[...]
    w = w_ref[...]
    cout, cin = w.shape

    # 1x1 conv as Cin broadcast FMAs on the VPU (MXU would be <1% utilized).
    y = w[:, 0:1].reshape(1, cout, 1) * x[:, 0:1, :]
    for ci in range(1, cin):
        y = y + w[:, ci:ci + 1].reshape(1, cout, 1) * x[:, ci:ci + 1, :]
    # y: (N, Cout, HW) f32  (conv bias omitted: cancels under train-mode BN)

    # Train-mode batch statistics over (N, HW) per output channel.
    s = jnp.sum(jnp.sum(y, axis=2, keepdims=True), axis=0, keepdims=True)
    ssq = jnp.sum(jnp.sum(y * y, axis=2, keepdims=True), axis=0, keepdims=True)
    mean = s * inv_m
    var = jnp.maximum(ssq * inv_m - mean * mean, 0.0)   # clamp: one-pass var

    scale = g_ref[...] * jax.lax.rsqrt(var + BN_EPS)
    shift = b_ref[...] - mean * scale
    o_ref[...] = jnp.maximum(y * scale + shift, 0.0).astype(o_ref.dtype)


def _forward_single_shot(x3d, w2d, gamma, beta):
    n, cin, hw = x3d.shape
    cout = w2d.shape[0]
    inv_m = 1.0 / float(n * hw)
    kernel = functools.partial(_fused_small_kernel, inv_m=inv_m)
    return pl.pallas_call(
        kernel,
        out_shape=jax.ShapeDtypeStruct((n, cout, hw), jnp.float32),
    )(x3d, w2d, gamma.reshape(1, cout, 1), beta.reshape(1, cout, 1))


# --------------------------------------------------------------------------- #
# Tiled path: pass 1 (x statistics) + tiny JAX fold + pass 2 (folded apply).
# --------------------------------------------------------------------------- #
def _xstats_kernel(x_ref, p_ref):
    # x_ref: (Cin, TH) lane-dense spatial tile of one batch element.
    # p_ref: (Cin, Cin+1) per-block partials:
    #   p[:, 0]   = sum over tile of x_i
    #   p[:, 1+j] = sum over tile of x_i * x_j   (Gram column j)
    x = x_ref[...]
    cin = x.shape[0]
    p_ref[:, 0:1] = jnp.sum(x, axis=1, keepdims=True)
    for j in range(cin):
        p_ref[:, j + 1:j + 2] = jnp.sum(x * x[j:j + 1, :], axis=1,
                                        keepdims=True)


def _apply_kernel(x_ref, wf_ref, sh_ref, o_ref):
    # x_ref: (Cin, TH)  wf_ref: (Cout, Cin) BN-folded weights
    # sh_ref: (Cout, 1) folded shift       o_ref: (Cout, TH)
    x = x_ref[...]
    wf = wf_ref[...]
    cin = x.shape[0]
    y = sh_ref[...] + wf[:, 0:1] * x[0:1, :]
    for ci in range(1, cin):
        y = y + wf[:, ci:ci + 1] * x[ci:ci + 1, :]
    o_ref[...] = jnp.maximum(y, 0.0).astype(o_ref.dtype)


def _round_up(a, b):
    return (a + b - 1) // b * b


def _pick_spatial_tile(hw_pad, max_tile):
    """Largest lane tile (multiple of 128, <= max_tile) dividing hw_pad.
    hw_pad must already be a multiple of 128, so 128 always works."""
    if hw_pad <= max_tile:
        return hw_pad
    t = (max_tile // 128) * 128
    while t >= 128:
        if hw_pad % t == 0:
            return t
        t -= 128
    return 128


def _forward_tiled(x3d, w2d, gamma, beta, *, max_tile=16384):
    n, cin, hw = x3d.shape
    cout = w2d.shape[0]

    # Zero-pad HW to a multiple of 128: keeps every store lane-dense and every
    # stats block fully valid (zeros contribute nothing to sum / Gram).
    hw_pad = _round_up(hw, 128)
    if hw_pad != hw:
        x3d = jnp.pad(x3d, ((0, 0), (0, 0), (0, hw_pad - hw)))
    th = _pick_spatial_tile(hw_pad, max_tile)
    n_tiles = hw_pad // th

    # ---- pass 1: per-block x statistics (no conv work here) ---------------
    partials = pl.pallas_call(
        _xstats_kernel,
        out_shape=jax.ShapeDtypeStruct((n, n_tiles, cin, cin + 1),
                                       jnp.float32),
        grid=(n, n_tiles),
        in_specs=[pl.BlockSpec((None, cin, th), lambda b, t: (b, 0, t))],
        out_specs=pl.BlockSpec((None, None, cin, cin + 1),
                               lambda b, t: (b, t, 0, 0)),
        compiler_params=pltpu.CompilerParams(
            dimension_semantics=("parallel", "parallel")),
    )(x3d)

    # ---- tiny JAX reduction + BN fold --------------------------------------
    stats = jnp.sum(partials, axis=(0, 1))            # (Cin, Cin+1)
    m = float(n * hw)                                  # valid element count
    mean_x = stats[:, 0] / m                           # (Cin,)
    exx = stats[:, 1:] / m                             # (Cin, Cin)
    mean_y = w2d @ mean_x                              # (Cout,) (bias dropped)
    eyy = jnp.einsum('oi,ij,oj->o', w2d, exx, w2d)     # (Cout,)
    var = jnp.maximum(eyy - mean_y * mean_y, 0.0)
    scale = gamma * jax.lax.rsqrt(var + BN_EPS)        # (Cout,)
    w_fold = w2d * scale[:, None]                      # (Cout, Cin)
    shift = (beta - mean_y * scale).reshape(cout, 1)   # (Cout, 1)

    # ---- pass 2: folded conv + ReLU, lane-dense stores, megacore-parallel --
    out3d = pl.pallas_call(
        _apply_kernel,
        out_shape=jax.ShapeDtypeStruct((n, cout, hw_pad), jnp.float32),
        grid=(n, n_tiles),
        in_specs=[
            pl.BlockSpec((None, cin, th), lambda b, t: (b, 0, t)),
            pl.BlockSpec((cout, cin), lambda b, t: (0, 0)),
            pl.BlockSpec((cout, 1), lambda b, t: (0, 0)),
        ],
        out_specs=pl.BlockSpec((None, cout, th), lambda b, t: (b, 0, t)),
        compiler_params=pltpu.CompilerParams(
            dimension_semantics=("parallel", "parallel")),
    )(x3d, w_fold, shift)

    return out3d[:, :, :hw]


# --------------------------------------------------------------------------- #
# Public forward.
# --------------------------------------------------------------------------- #
def model4_forward(x_nchw, w_conv, b_conv, gamma, beta, *, max_tile=16384):
    """relu(bn1(conv1(x))) with training-mode batch statistics.

    x_nchw: (N, Cin, H, W) f32  ->  (N, Cout, H, W) f32.
    b_conv is accepted for interface parity but not applied: a constant
    per-channel bias cancels exactly under train-mode BatchNorm.
    """
    del b_conv
    n, cin, h, wd = x_nchw.shape
    cout = w_conv.shape[0]
    hw = h * wd

    x3d = x_nchw.reshape(n, cin, hw)          # free reshape, no HBM transpose
    w2d = w_conv.reshape(cout, cin)

    total_bytes = 4 * n * hw * (cin + 2 * cout)   # x + y + out working set
    if total_bytes <= _SMALL_PATH_MAX_BYTES:
        out3d = _forward_single_shot(x3d, w2d, gamma, beta)
    else:
        out3d = _forward_tiled(x3d, w2d, gamma, beta, max_tile=max_tile)
    return out3d.reshape(n, cout, h, wd)


# --------------------------------------------------------------------------- #
# Pure-JAX reference.
# --------------------------------------------------------------------------- #
def _reference(x, w_conv, b_conv, gamma, beta):
    n, cin, h, wd = x.shape
    cout = w_conv.shape[0]
    y = jnp.einsum('oc,nchw->nohw', w_conv.reshape(cout, cin), x)
    y = y + b_conv.reshape(1, cout, 1, 1)
    mean = jnp.mean(y, axis=(0, 2, 3), keepdims=True)
    var = jnp.mean(jnp.square(y - mean), axis=(0, 2, 3), keepdims=True)
    y_hat = (y - mean) * jax.lax.rsqrt(var + BN_EPS)
    out = gamma.reshape(1, cout, 1, 1) * y_hat + beta.reshape(1, cout, 1, 1)
    return jnp.maximum(out, 0.0)


if __name__ == "__main__":
    # Shapes consistent with the module: batch=2, ch_in=4, ch_out=8, 16x16.
    N, CIN, COUT, H, W = 2, 4, 8, 16, 16

    key = jax.random.PRNGKey(0)
    kx, kw, kb, kx2, kg, kbe = jax.random.split(key, 6)

    x = jax.random.normal(kx, (N, CIN, H, W), dtype=jnp.float32)
    bound = 1.0 / (CIN ** 0.5)
    w_conv = jax.random.uniform(kw, (COUT, CIN, 1, 1), jnp.float32,
                                -bound, bound)
    b_conv = jax.random.uniform(kb, (COUT,), jnp.float32, -bound, bound)
    gamma = jnp.ones((COUT,), jnp.float32)
    beta = jnp.zeros((COUT,), jnp.float32)

    # Single-shot fused path (the shipped shapes).
    out = model4_forward(x, w_conv, b_conv, gamma, beta)
    jax.block_until_ready(out)
    assert out.shape == (N, COUT, H, W), out.shape
    ref = _reference(x, w_conv, b_conv, gamma, beta)
    err = float(jnp.max(jnp.abs(out - ref)))
    assert jnp.allclose(out, ref, atol=1e-3, rtol=1e-3), err

    # Also exercise the tiled two-pass path (non-128-multiple HW -> padding,
    # multi-tile grid, parallel dimension semantics, x-stat reconstruction).
    H2, W2 = 20, 20                       # HW=400 -> padded to 512 -> 4 tiles
    x2 = jax.random.normal(kx2, (N, CIN, H2, W2), dtype=jnp.float32)
    gamma2 = jax.random.uniform(kg, (COUT,), jnp.float32, 0.5, 1.5)
    beta2 = jax.random.uniform(kbe, (COUT,), jnp.float32, -0.5, 0.5)
    out2 = _forward_tiled(x2.reshape(N, CIN, H2 * W2),
                          w_conv.reshape(COUT, CIN),
                          gamma2, beta2, max_tile=128)
    out2 = out2.reshape(N, COUT, H2, W2)
    jax.block_until_ready(out2)
    ref2 = _reference(x2, w_conv, b_conv, gamma2, beta2)
    err2 = float(jnp.max(jnp.abs(out2 - ref2)))
    assert jnp.allclose(out2, ref2, atol=1e-3, rtol=1e-3), err2

    print("KERNEL_OK")
</pallas_src>

<mosaic_0001>
module attributes {stable_mosaic.version = 11 : i64} {
  func.func @_fused_small_kernel(%arg0: memref<2x4x256xf32, #tpu.memory_space<vmem>>, %arg1: memref<8x4xf32, #tpu.memory_space<vmem>>, %arg2: memref<1x8x1xf32, #tpu.memory_space<vmem>>, %arg3: memref<1x8x1xf32, #tpu.memory_space<vmem>>, %arg4: memref<2x8x256xf32, #tpu.memory_space<vmem>>) attributes {dimension_semantics = [], scalar_prefetch = 0 : i64, scratch_operands = 0 : i64, tpu.core_type = #tpu.core_type<tc>} {
    %c0 = arith.constant 0 : index
    %c0_0 = arith.constant 0 : index
    %c0_1 = arith.constant 0 : index
    %0 = vector.load %arg0[%c0, %c0_0, %c0_1] : memref<2x4x256xf32, #tpu.memory_space<vmem>>, vector<2x4x256xf32>
    %c0_2 = arith.constant 0 : index
    %c0_3 = arith.constant 0 : index
    %1 = vector.load %arg1[%c0_2, %c0_3] : memref<8x4xf32, #tpu.memory_space<vmem>>, vector<8x4xf32>
    %2 = vector.extract_strided_slice %1 {offsets = [0, 0], sizes = [8, 1], strides = [1, 1]} : vector<8x4xf32> to vector<8x1xf32>
    %3 = vector.shape_cast %2 : vector<8x1xf32> to vector<1x8x1xf32>
    %4 = vector.extract_strided_slice %0 {offsets = [0, 0, 0], sizes = [2, 1, 256], strides = [1, 1, 1]} : vector<2x4x256xf32> to vector<2x1x256xf32>
    %5 = vector.broadcast %3 : vector<1x8x1xf32> to vector<2x8x256xf32>
    %6 = vector.broadcast %4 : vector<2x1x256xf32> to vector<2x8x256xf32>
    %7 = arith.mulf %5, %6 : vector<2x8x256xf32>
    %8 = vector.extract_strided_slice %1 {offsets = [0, 1], sizes = [8, 1], strides = [1, 1]} : vector<8x4xf32> to vector<8x1xf32>
    %9 = vector.shape_cast %8 : vector<8x1xf32> to vector<1x8x1xf32>
    %10 = vector.extract_strided_slice %0 {offsets = [0, 1, 0], sizes = [2, 1, 256], strides = [1, 1, 1]} : vector<2x4x256xf32> to vector<2x1x256xf32>
    %11 = vector.broadcast %9 : vector<1x8x1xf32> to vector<2x8x256xf32>
    %12 = vector.broadcast %10 : vector<2x1x256xf32> to vector<2x8x256xf32>
    %13 = arith.mulf %11, %12 : vector<2x8x256xf32>
    %14 = arith.addf %7, %13 : vector<2x8x256xf32>
    %15 = vector.extract_strided_slice %1 {offsets = [0, 2], sizes = [8, 1], strides = [1, 1]} : vector<8x4xf32> to vector<8x1xf32>
    %16 = vector.shape_cast %15 : vector<8x1xf32> to vector<1x8x1xf32>
    %17 = vector.extract_strided_slice %0 {offsets = [0, 2, 0], sizes = [2, 1, 256], strides = [1, 1, 1]} : vector<2x4x256xf32> to vector<2x1x256xf32>
    %18 = vector.broadcast %16 : vector<1x8x1xf32> to vector<2x8x256xf32>
    %19 = vector.broadcast %17 : vector<2x1x256xf32> to vector<2x8x256xf32>
    %20 = arith.mulf %18, %19 : vector<2x8x256xf32>
    %21 = arith.addf %14, %20 : vector<2x8x256xf32>
    %22 = vector.extract_strided_slice %1 {offsets = [0, 3], sizes = [8, 1], strides = [1, 1]} : vector<8x4xf32> to vector<8x1xf32>
    %23 = vector.shape_cast %22 : vector<8x1xf32> to vector<1x8x1xf32>
    %24 = vector.extract_strided_slice %0 {offsets = [0, 3, 0], sizes = [2, 1, 256], strides = [1, 1, 1]} : vector<2x4x256xf32> to vector<2x1x256xf32>
    %25 = vector.broadcast %23 : vector<1x8x1xf32> to vector<2x8x256xf32>
    %26 = vector.broadcast %24 : vector<2x1x256xf32> to vector<2x8x256xf32>
    %27 = arith.mulf %25, %26 : vector<2x8x256xf32>
    %28 = arith.addf %21, %27 : vector<2x8x256xf32>
    %cst = arith.constant dense<0.000000e+00> : vector<2x8xf32>
    %29 = vector.multi_reduction <add>, %28, %cst [2] : vector<2x8x256xf32> to vector<2x8xf32>
    %30 = vector.shape_cast %29 : vector<2x8xf32> to vector<2x8x1xf32>
    %cst_4 = arith.constant dense<0.000000e+00> : vector<8x1xf32>
    %31 = vector.multi_reduction <add>, %30, %cst_4 [0] : vector<2x8x1xf32> to vector<8x1xf32>
    %32 = vector.shape_cast %31 : vector<8x1xf32> to vector<1x8x1xf32>
    %33 = arith.mulf %28, %28 : vector<2x8x256xf32>
    %cst_5 = arith.constant dense<0.000000e+00> : vector<2x8xf32>
    %34 = vector.multi_reduction <add>, %33, %cst_5 [2] : vector<2x8x256xf32> to vector<2x8xf32>
    %35 = vector.shape_cast %34 : vector<2x8xf32> to vector<2x8x1xf32>
    %cst_6 = arith.constant dense<0.000000e+00> : vector<8x1xf32>
    %36 = vector.multi_reduction <add>, %35, %cst_6 [0] : vector<2x8x1xf32> to vector<8x1xf32>
    %37 = vector.shape_cast %36 : vector<8x1xf32> to vector<1x8x1xf32>
    %cst_7 = arith.constant 0.001953125 : f32
    %38 = vector.broadcast %cst_7 : f32 to vector<1x8x1xf32>
    %39 = arith.mulf %32, %38 : vector<1x8x1xf32>
    %cst_8 = arith.constant 0.001953125 : f32
    %40 = vector.broadcast %cst_8 : f32 to vector<1x8x1xf32>
    %41 = arith.mulf %37, %40 : vector<1x8x1xf32>
    %42 = arith.mulf %39, %39 : vector<1x8x1xf32>
    %43 = arith.subf %41, %42 : vector<1x8x1xf32>
    %cst_9 = arith.constant 0.000000e+00 : f32
    %44 = vector.broadcast %cst_9 : f32 to vector<1x8x1xf32>
    %45 = arith.maximumf %43, %44 : vector<1x8x1xf32>
    %c0_10 = arith.constant 0 : index
    %c0_11 = arith.constant 0 : index
    %c0_12 = arith.constant 0 : index
    %46 = vector.load %arg2[%c0_10, %c0_11, %c0_12] : memref<1x8x1xf32, #tpu.memory_space<vmem>>, vector<1x8x1xf32>
    %cst_13 = arith.constant 9.99999974E-6 : f32
    %47 = vector.broadcast %cst_13 : f32 to vector<1x8x1xf32>
    %48 = arith.addf %45, %47 : vector<1x8x1xf32>
    %49 = math.rsqrt %48 : vector<1x8x1xf32>
    %50 = arith.mulf %46, %49 : vector<1x8x1xf32>
    %c0_14 = arith.constant 0 : index
    %c0_15 = arith.constant 0 : index
    %c0_16 = arith.constant 0 : index
    %51 = vector.load %arg3[%c0_14, %c0_15, %c0_16] : memref<1x8x1xf32, #tpu.memory_space<vmem>>, vector<1x8x1xf32>
    %52 = arith.mulf %39, %50 : vector<1x8x1xf32>
    %53 = arith.subf %51, %52 : vector<1x8x1xf32>
    %54 = vector.broadcast %50 : vector<1x8x1xf32> to vector<2x8x256xf32>
    %55 = arith.mulf %28, %54 : vector<2x8x256xf32>
    %56 = vector.broadcast %53 : vector<1x8x1xf32> to vector<2x8x256xf32>
    %57 = arith.addf %55, %56 : vector<2x8x256xf32>
    %cst_17 = arith.constant 0.000000e+00 : f32
    %58 = vector.broadcast %cst_17 : f32 to vector<2x8x256xf32>
    %59 = arith.maximumf %57, %58 : vector<2x8x256xf32>
    %c0_18 = arith.constant 0 : index
    %c0_19 = arith.constant 0 : index
    %c0_20 = arith.constant 0 : index
    %60 = vector.load %arg4[%c0_18, %c0_19, %c0_20] : memref<2x8x256xf32, #tpu.memory_space<vmem>>, vector<2x8x256xf32>
    tpu.vector_store %arg4[%c0_18, %c0_19, %c0_20], %59 {strides = array<i32>} : memref<2x8x256xf32, #tpu.memory_space<vmem>>, vector<2x8x256xf32>,
    return
  }
}

</mosaic_0001>

<llo_original>
// kernel: tpu_custom_call.1
$region0: #{tpu_custom_call.1}
  #allocation0 [shape = 'u32[]', space=smem, size = 0x4, offset = 0x4, fixed_abs, tag = 'smem constant byte address 0x4 - core index']
  #allocation1 [shape = 'u32[144,128]{1,0:T(1,128)}', space=vmem, size = 0x12000, scoped, tag = 'internal scratch']
  %s0 = inlined_call_operand.vmem [shape: f32[2,4,256], index: 0, kind: input, shape index: {}]
  %s1 = inlined_call_operand.vmem [shape: f32[8,4], index: 1, kind: input, shape index: {}]
  %s2 = inlined_call_operand.vmem [shape: f32[1,8,1], index: 2, kind: input, shape index: {}]
  %s3 = inlined_call_operand.vmem [shape: f32[1,8,1], index: 3, kind: input, shape index: {}]
  %s4 = inlined_call_operand.hbm [shape: f32[2,8,256], index: 4, kind: output, shape index: {}]
  %s5 = sld [smem:[#allocation0]]
  $region26: #{tpu_custom_call.1} parent=0
    _
  %s7 = ssub.s32 1, %s5
  %s8 = scalar_select 0, %s7, %s5
  $region1: #{tpu_custom_call.1} parent=0
    #allocation2 [shape = 'u8[16384]{0}', space=vmem, size = 0x4000, scoped, tag = 'output window, operand 0, single buffered']
    #allocation3 [shape = 's32[1]{0}', space=sflag, size = 0x4, scoped, tag = 'scoped memory for tpu_custom_call.1']
    %9 = vsyncpa [#allocation3], 0
    // Predicated region
    $region2: #{tpu_custom_call.1} parent=1 // pred_check
      _
    $region3: #{tpu_custom_call.1} parent=1 // pred_check_branch
      %11 = sbr.rel (0) target = $region5
    $region4: #{tpu_custom_call.1} parent=1 // pred_region
      _
    $region5: #{tpu_custom_call.1} parent=1 // pred_fallthru
      _
    // Predicated region
    $region6: #{tpu_custom_call.1} parent=1 // pred_check
      _
    $region7: #{tpu_custom_call.1} parent=1 // pred_check_branch
      %13 = sbr.rel (0) target = $region9
    $region8: #{tpu_custom_call.1} parent=1 // pred_region
      _
    $region9: #{tpu_custom_call.1} parent=1 // pred_fallthru
      _
    // Predicated region
    $region10: #{tpu_custom_call.1} parent=1 // pred_check
      _
    $region11: #{tpu_custom_call.1} parent=1 // pred_check_branch
      %15 = sbr.rel (0) target = $region13
    $region12: #{tpu_custom_call.1} parent=1 // pred_region
      _
    $region13: #{tpu_custom_call.1} parent=1 // pred_fallthru
      _
    // Predicated region
    $region14: #{tpu_custom_call.1} parent=1 // pred_check
      _
    $region15: #{tpu_custom_call.1} parent=1 // pred_check_branch
      %17 = sbr.rel (0) target = $region17
    $region16: #{tpu_custom_call.1} parent=1 // pred_region
      _
    $region17: #{tpu_custom_call.1} parent=1 // pred_fallthru
      _
    %v18 = vld [vmem:[%s0] sm:$0xff]
    %v19 = vld [vmem:[%s0 + $0x8] sm:$0xff]
    %v20 = vld [vmem:[%s1] sm:$0xff]
    %22 = vset.pattern.permute.xlu0 0
    %23 = vperm.xlu0 %22, %v20
    %v24 = vpop.permute.xlu0 %23
    %v28 = vlaneseq
    %v29 = vshrl.u32 %v28, 7
    %v30 = vsub.s32 0, %v29
    %v31 = vrot.slane %v18, %v30
    %v32 = vlaneseq
    %v33 = vshrl.u32 %v32, 7
    %v34 = vsub.s32 4, %v33
    %v35 = vrot.slane %v18, %v34
    %v36 = vlaneseq
    %v37 = vshrl.u32 %v36, 7
    %v38 = vsub.s32 0, %v37
    %v39 = vrot.slane %v19, %v38
    %v40 = vlaneseq
    %v41 = vshrl.u32 %v40, 7
    %v42 = vsub.s32 4, %v41
    %v43 = vrot.slane %v19, %v42
    %v48 = vlaneseq
    %v49 = vshrl.u32 %v48, 7
    %v50 = vsub.s32 0, %v49
    %v51 = vrot.slane %v31, %v50
    %v52 = vlaneseq
    %v53 = vshrl.u32 %v52, 7
    %v54 = vsub.s32 0, %v53
    %v55 = vrot.slane %v35, %v54
    %v56 = vlaneseq
    %v57 = vshrl.u32 %v56, 7
    %v58 = vsub.s32 0, %v57
    %v59 = vrot.slane %v39, %v58
    %v60 = vlaneseq
    %v61 = vshrl.u32 %v60, 7
    %v62 = vsub.s32 0, %v61
    %v63 = vrot.slane %v43, %v62
    %v64 = vmul.f32 %v24, %v51
    %v65 = vmul.f32 %v24, %v55
    %v66 = vmul.f32 %v24, %v59
    %v67 = vmul.f32 %v24, %v63
    %68 = vset.pattern.permute.xlu0 1
    %69 = vperm.xlu0 %68, %v20
    %v70 = vpop.permute.xlu0 %69
    %v72 = vlaneseq
    %v73 = vshrl.u32 %v72, 7
    %v74 = vsub.s32 1, %v73
    %v75 = vrot.slane %v18, %v74
    %v76 = vlaneseq
    %v77 = vshrl.u32 %v76, 7
    %v78 = vsub.s32 5, %v77
    %v79 = vrot.slane %v18, %v78
    %v80 = vlaneseq
    %v81 = vshrl.u32 %v80, 7
    %v82 = vsub.s32 1, %v81
    %v83 = vrot.slane %v19, %v82
    %v84 = vlaneseq
    %v85 = vshrl.u32 %v84, 7
    %v86 = vsub.s32 5, %v85
    %v87 = vrot.slane %v19, %v86
    %v92 = vlaneseq
    %v93 = vshrl.u32 %v92, 7
    %v94 = vsub.s32 1, %v93
    %v95 = vrot.slane %v75, %v94
    %v96 = vlaneseq
    %v97 = vshrl.u32 %v96, 7
    %v98 = vsub.s32 1, %v97
    %v99 = vrot.slane %v79, %v98
    %v100 = vlaneseq
    %v101 = vshrl.u32 %v100, 7
    %v102 = vsub.s32 1, %v101
    %v103 = vrot.slane %v83, %v102
    %v104 = vlaneseq
    %v105 = vshrl.u32 %v104, 7
    %v106 = vsub.s32 1, %v105
    %v107 = vrot.slane %v87, %v106
    %v108 = vmul.f32 %v70, %v95
    %v109 = vmul.f32 %v70, %v99
    %v110 = vmul.f32 %v70, %v103
    %v111 = vmul.f32 %v70, %v107
    %v112 = vadd.f32 %v64, %v108
    %v113 = vadd.f32 %v65, %v109
    %v114 = vadd.f32 %v66, %v110
    %v115 = vadd.f32 %v67, %v111
    %116 = vset.pattern.permute.xlu0 2
    %117 = vperm.xlu0 %116, %v20
    %v118 = vpop.permute.xlu0 %117
    %v120 = vlaneseq
    %v121 = vshrl.u32 %v120, 7
    %v122 = vsub.s32 2, %v121
    %v123 = vrot.slane %v18, %v122
    %v124 = vlaneseq
    %v125 = vshrl.u32 %v124, 7
    %v126 = vsub.s32 6, %v125
    %v127 = vrot.slane %v18, %v126
    %v128 = vlaneseq
    %v129 = vshrl.u32 %v128, 7
    %v130 = vsub.s32 2, %v129
    %v131 = vrot.slane %v19, %v130
    %v132 = vlaneseq
    %v133 = vshrl.u32 %v132, 7
    %v134 = vsub.s32 6, %v133
    %v135 = vrot.slane %v19, %v134
    %v140 = vlaneseq
    %v141 = vshrl.u32 %v140, 7
    %v142 = vsub.s32 2, %v141
    %v143 = vrot.slane %v123, %v142
    %v144 = vlaneseq
    %v145 = vshrl.u32 %v144, 7
    %v146 = vsub.s32 2, %v145
    %v147 = vrot.slane %v127, %v146
    %v148 = vlaneseq
    %v149 = vshrl.u32 %v148, 7
    %v150 = vsub.s32 2, %v149
    %v151 = vrot.slane %v131, %v150
    %v152 = vlaneseq
    %v153 = vshrl.u32 %v152, 7
    %v154 = vsub.s32 2, %v153
    %v155 = vrot.slane %v135, %v154
    %v156 = vmul.f32 %v118, %v143
    %v157 = vmul.f32 %v118, %v147
    %v158 = vmul.f32 %v118, %v151
    %v159 = vmul.f32 %v118, %v155
    %v160 = vadd.f32 %v112, %v156
    %v161 = vadd.f32 %v113, %v157
    %v162 = vadd.f32 %v114, %v158
    %v163 = vadd.f32 %v115, %v159
    %164 = vset.pattern.permute.xlu0 3
    %165 = vperm.xlu0 %164, %v20
    %v166 = vpop.permute.xlu0 %165
    %v168 = vlaneseq
    %v169 = vshrl.u32 %v168, 7
    %v170 = vsub.s32 3, %v169
    %v171 = vrot.slane %v18, %v170
    %v172 = vlaneseq
    %v173 = vshrl.u32 %v172, 7
    %v174 = vsub.s32 7, %v173
    %v175 = vrot.slane %v18, %v174
    %v176 = vlaneseq
    %v177 = vshrl.u32 %v176, 7
    %v178 = vsub.s32 3, %v177
    %v179 = vrot.slane %v19, %v178
    %v180 = vlaneseq
    %v181 = vshrl.u32 %v180, 7
    %v182 = vsub.s32 7, %v181
    %v183 = vrot.slane %v19, %v182
    %v188 = vlaneseq
    %v189 = vshrl.u32 %v188, 7
    %v190 = vsub.s32 3, %v189
    %v191 = vrot.slane %v171, %v190
    %v192 = vlaneseq
    %v193 = vshrl.u32 %v192, 7
    %v194 = vsub.s32 3, %v193
    %v195 = vrot.slane %v175, %v194
    %v196 = vlaneseq
    %v197 = vshrl.u32 %v196, 7
    %v198 = vsub.s32 3, %v197
    %v199 = vrot.slane %v179, %v198
    %v200 = vlaneseq
    %v201 = vshrl.u32 %v200, 7
    %v202 = vsub.s32 3, %v201
    %v203 = vrot.slane %v183, %v202
    %v204 = vmul.f32 %v166, %v191
    %v205 = vmul.f32 %v166, %v195
    %v206 = vmul.f32 %v166, %v199
    %v207 = vmul.f32 %v166, %v203
    %v208 = vadd.f32 %v160, %v204
    %v209 = vadd.f32 %v161, %v205
    %v210 = vadd.f32 %v162, %v206
    %v211 = vadd.f32 %v163, %v207
    %v212 = vadd.f32 %v208, %v209
    %213 = vadd.xlane.f32.xlu0 %v212
    %v214 = vpop.xlane.xlu0 %213
    %v215 = vadd.f32 %v210, %v211
    %216 = vadd.xlane.f32.xlu0 %v215
    %v217 = vpop.xlane.xlu0 %216
    %v218 = vadd.f32 %v214, %v217
    %v219 = vmul.f32 %v208, %v208
    %v220 = vmul.f32 %v209, %v209
    %v221 = vmul.f32 %v210, %v210
    %v222 = vmul.f32 %v211, %v211
    %v223 = vadd.f32 %v219, %v220
    %224 = vadd.xlane.f32.xlu0 %v223
    %v225 = vpop.xlane.xlu0 %224
    %v226 = vadd.f32 %v221, %v222
    %227 = vadd.xlane.f32.xlu0 %v226
    %v228 = vpop.xlane.xlu0 %227
    %v229 = vadd.f32 %v225, %v228
    %v230 = vmul.f32 %v218, 0.001953125
    %v231 = vmul.f32 %v229, 0.001953125
    %v232 = vmul.f32 %v230, %v230
    %v233 = vsub.f32 %v231, %v232
    %v234 = vmax.f32 %v233, 0.0
    %v235 = vld [vmem:[%s2] sm:$0xff]
    %v236 = vadd.f32 %v234, 1e-05
    %v237 = vrsqrt.pop %v236
    %v238 = vmul.f32 %v235, %v237
    %v239 = vld [vmem:[%s3] sm:$0xff]
    %v240 = vmul.f32 %v230, %v238
    %v241 = vsub.f32 %v239, %v240
    %243 = vset.pattern.permute.xlu0 0
    %244 = vperm.xlu0 %243, %v238
    %v245 = vpop.permute.xlu0 %244
    %v247 = vmul.f32 %v208, %v245
    %v248 = vmul.f32 %v209, %v245
    %v249 = vmul.f32 %v210, %v245
    %v250 = vmul.f32 %v211, %v245
    %252 = vset.pattern.permute.xlu0 0
    %253 = vperm.xlu0 %252, %v241
    %v254 = vpop.permute.xlu0 %253
    %v256 = vadd.f32 %v247, %v254
    %v257 = vadd.f32 %v248, %v254
    %v258 = vadd.f32 %v249, %v254
    %v259 = vadd.f32 %v250, %v254
    %v260 = vmax.f32 %v256, 0.0
    %v261 = vmax.f32 %v257, 0.0
    %v262 = vmax.f32 %v258, 0.0
    %v263 = vmax.f32 %v259, 0.0
    %264 = vst [vmem:[#allocation2] sm:$0xff] %v260
    %265 = vst [vmem:[#allocation2 + $0x8] sm:$0xff] %v261
    %266 = vst [vmem:[#allocation2 + $0x10] sm:$0xff] %v262
    %267 = vst [vmem:[#allocation2 + $0x18] sm:$0xff] %v263
    // Predicated region
    $region18: #{tpu_custom_call.1} parent=1 // pred_check
      _
    $region19: #{tpu_custom_call.1} parent=1 // pred_check_branch
      %269 = sbr.rel (0) target = $region21
    $region20: #{tpu_custom_call.1} parent=1 // pred_region
      %s271 = ssub.s32 512, 512
      %272 = vsyncadd [#allocation3], %s271
      %s273 = sshll.u32 [#allocation2], 4
      %s274 = int_to_ptr.vmem [resolvable:$true] %s273
      %279 = dma.vmem_to_hbm [thread:$0]  %s274, 512, %s4, [#allocation3], 256, 256, 16
    $region21: #{tpu_custom_call.1} parent=1 // pred_fallthru
      _
    // Predicated region
    $region22: #{tpu_custom_call.1} parent=1 // pred_check
      _
    $region23: #{tpu_custom_call.1} parent=1 // pred_check_branch
      %281 = sbr.rel (0) target = $region25
    $region24: #{tpu_custom_call.1} parent=1 // pred_region
      %282 = dma.done [#allocation3], 512
    $region25: #{tpu_custom_call.1} parent=1 // pred_fallthru
      _
    %283 = vsyncpa [#allocation3], 1

</llo_original>
